<compile_context>
chip_gen: v7x
topology: tpu7x:2x2x1
jax: 0.10.0
libtpu: 0.0.40
codegen_flags: <defaults>
</compile_context>

<pallas_src>
import jax
import jax.numpy as jnp
from jax.experimental import pallas as pl
from jax.experimental.pallas import tpu as pltpu

K = 7            # conv kernel size
PAD = 3          # 'same' padding per conv
HALO = 2 * PAD   # total input halo for the fused (conv->conv) chain


def _fold_bn(conv_bias, gamma, beta, mean, var, eps=1e-5):
    scale = gamma / jnp.sqrt(var + eps)
    shift = (conv_bias - mean) * scale + beta
    return scale, shift


def _pick_tile(L):
    if L % 128 == 0:
        for cand in (512, 256, 128):
            if L % cand == 0:
                return cand
    return L  # full length in one tile


def double_conv(x_ncl, params, *, compute_dtype=jnp.float32, tl=None):
    """x_ncl: (N, Cin, L) float32 -> (N, Cout, L) float32 (PyTorch NCL layout)."""
    N, Cin, L = x_ncl.shape
    Cout = params['w_conv2'].shape[0]
    assert L >= HALO, "length must be >= 6 for this kernel"

    TL = _pick_tile(L) if tl is None else tl
    assert L % TL == 0 and TL >= HALO, (L, TL)
    nL = L // TL
    W1 = TL + 2 * PAD  # width of the intermediate (post conv1) window per tile

    # PyTorch conv weight (Cout, Cin, K) -> im2col weight (Cout, K*Cin),
    # row layout chosen to match X[k*C + c, t] built in the kernel.
    w1r = jnp.transpose(params['w_conv1'], (0, 2, 1)).reshape(Cout, K * Cin)
    w2r = jnp.transpose(params['w_conv2'], (0, 2, 1)).reshape(Cout, K * Cout)

    s1, b1 = _fold_bn(params['b_conv1'], params['gamma1'], params['beta1'],
                      params['mean1'], params['var1'])
    s2, b2 = _fold_bn(params['b_conv2'], params['gamma2'], params['beta2'],
                      params['mean2'], params['var2'])
    s1 = s1.reshape(Cout, 1); b1 = b1.reshape(Cout, 1)
    s2 = s2.reshape(Cout, 1); b2 = b2.reshape(Cout, 1)

    def kernel(xl_ref, xc_ref, xr_ref, w1_ref, s1_ref, b1_ref,
               w2_ref, s2_ref, b2_ref, o_ref):
        j = pl.program_id(1)
        l0 = j * TL                      # global start of this output tile

        xl = xl_ref[0]                   # (Cin, TL) left neighbour (clamped)
        xc = xc_ref[0]                   # (Cin, TL) this tile
        xr = xr_ref[0]                   # (Cin, TL) right neighbour (clamped)

        # Input window covering global [l0-HALO, l0+TL+HALO).  Mask everything
        # outside [0, L): this implements conv1's zero padding and also zeroes
        # the garbage coming from the clamped neighbour blocks at the edges.
        xw = jnp.concatenate([xl[:, TL - HALO:], xc, xr[:, :HALO]], axis=-1)
        gx = l0 - HALO + jax.lax.broadcasted_iota(
            jnp.int32, (Cin, TL + 2 * HALO), 1)
        xw = jnp.where((gx >= 0) & (gx < L), xw, 0.0)

        # ---- conv1: single im2col matmul on the MXU ----
        # X1[k*Cin + c, t] = xw[c, t + k]; column t is global position l0-PAD+t.
        x1 = jnp.concatenate([xw[:, k:k + W1] for k in range(K)], axis=0)
        h1 = jnp.dot(w1_ref[...].astype(compute_dtype), x1.astype(compute_dtype),
                     preferred_element_type=jnp.float32)              # (Cout, W1)
        h1 = jnp.maximum(h1 * s1_ref[...] + b1_ref[...], 0.0)         # BN + ReLU (f32)
        # conv2 zero-pads the *post-ReLU intermediate*: zero the out-of-range
        # halo columns explicitly.
        g1 = l0 - PAD + jax.lax.broadcasted_iota(jnp.int32, (Cout, W1), 1)
        h1 = jnp.where((g1 >= 0) & (g1 < L), h1, 0.0)

        # ---- conv2: single im2col matmul ----
        x2 = jnp.concatenate([h1[:, k:k + TL] for k in range(K)], axis=0)
        h2 = jnp.dot(w2_ref[...].astype(compute_dtype), x2.astype(compute_dtype),
                     preferred_element_type=jnp.float32)              # (Cout, TL)
        h2 = jnp.maximum(h2 * s2_ref[...] + b2_ref[...], 0.0)
        o_ref[0] = h2.astype(o_ref.dtype)

    x_block = (1, Cin, TL)

    def full(shape):  # small per-call constants: one block, fetched once
        return pl.BlockSpec(shape, lambda i, j: (0,) * len(shape))

    out = pl.pallas_call(
        kernel,
        out_shape=jax.ShapeDtypeStruct((N, Cout, L), x_ncl.dtype),
        grid=(N, nL),
        in_specs=[
            pl.BlockSpec(x_block, lambda i, j: (i, 0, jnp.maximum(j - 1, 0))),
            pl.BlockSpec(x_block, lambda i, j: (i, 0, j)),
            pl.BlockSpec(x_block, lambda i, j: (i, 0, jnp.minimum(j + 1, nL - 1))),
            full((Cout, K * Cin)),
            full((Cout, 1)), full((Cout, 1)),
            full((Cout, K * Cout)),
            full((Cout, 1)), full((Cout, 1)),
        ],
        out_specs=pl.BlockSpec((1, Cout, TL), lambda i, j: (i, 0, j)),
        compiler_params=pltpu.CompilerParams(
            dimension_semantics=("parallel", "parallel"),
            vmem_limit_bytes=32 * 1024 * 1024),
    )(x_ncl, x_ncl, x_ncl, w1r, s1, b1, w2r, s2, b2)
    return out


# ----------------------------- reference (pure JAX) --------------------------
def ref_double_conv(x_ncl, params):
    def conv_bn_relu(x, w, b, gamma, beta, mean, var):
        y = jax.lax.conv_general_dilated(
            x, w, window_strides=(1,), padding=[(PAD, PAD)],
            dimension_numbers=('NCH', 'OIH', 'NCH'))
        y = y + b[None, :, None]
        y = (y - mean[None, :, None]) / jnp.sqrt(var[None, :, None] + 1e-5)
        y = y * gamma[None, :, None] + beta[None, :, None]
        return jnp.maximum(y, 0.0)

    h = conv_bn_relu(x_ncl, params['w_conv1'], params['b_conv1'],
                     params['gamma1'], params['beta1'],
                     params['mean1'], params['var1'])
    return conv_bn_relu(h, params['w_conv2'], params['b_conv2'],
                        params['gamma2'], params['beta2'],
                        params['mean2'], params['var2'])


if __name__ == "__main__":
    key = jax.random.PRNGKey(0)

    def make_params(k, cin, cout):
        k_w1, k_b1, k_w2, k_b2 = jax.random.split(k, 4)
        return dict(
            w_conv1=jax.random.normal(k_w1, (cout, cin, K), jnp.float32) * 0.1,
            b_conv1=jax.random.normal(k_b1, (cout,), jnp.float32) * 0.1,
            w_conv2=jax.random.normal(k_w2, (cout, cout, K), jnp.float32) * 0.1,
            b_conv2=jax.random.normal(k_b2, (cout,), jnp.float32) * 0.1,
            # BatchNorm1d defaults (fresh module, eval semantics)
            gamma1=jnp.ones((cout,), jnp.float32), beta1=jnp.zeros((cout,), jnp.float32),
            mean1=jnp.zeros((cout,), jnp.float32), var1=jnp.ones((cout,), jnp.float32),
            gamma2=jnp.ones((cout,), jnp.float32), beta2=jnp.zeros((cout,), jnp.float32),
            mean2=jnp.zeros((cout,), jnp.float32), var2=jnp.ones((cout,), jnp.float32),
        )

    N, Cin, Cout, L = 2, 4, 8, 16
    k_x, k_p, k_x2 = jax.random.split(key, 3)
    params = make_params(k_p, Cin, Cout)

    # --- small shape from the module spec (single length tile) ---
    x = jax.random.normal(k_x, (N, Cin, L), dtype=jnp.float32)
    out = jax.block_until_ready(double_conv(x, params))
    ref = jax.block_until_ready(ref_double_conv(x, params))
    assert out.shape == (N, Cout, L), out.shape
    assert jnp.allclose(out, ref, atol=1e-5, rtol=1e-5), float(jnp.abs(out - ref).max())

    # --- multi-tile grid path: exercises the length-halo across tiles ---
    L2 = 256
    x2 = jax.random.normal(k_x2, (N, Cin, L2), dtype=jnp.float32)
    out2 = jax.block_until_ready(double_conv(x2, params, tl=128))
    ref2 = jax.block_until_ready(ref_double_conv(x2, params))
    assert out2.shape == (N, Cout, L2), out2.shape
    assert jnp.allclose(out2, ref2, atol=1e-5, rtol=1e-5), float(jnp.abs(out2 - ref2).max())

    # --- bf16 MXU inputs (v6e/v7x fast path); BN/ReLU stay f32 ---
    out_bf = jax.block_until_ready(
        double_conv(x2, params, tl=128, compute_dtype=jnp.bfloat16))
    assert float(jnp.abs(out_bf - ref2).max()) < 0.1, float(jnp.abs(out_bf - ref2).max())

    print("KERNEL_OK")
</pallas_src>

<mosaic_0001>
module attributes {stable_mosaic.version = 11 : i64} {
  func.func @kernel(%arg0: i32, %arg1: i32, %arg2: memref<1x4x16xf32, #tpu.memory_space<vmem>>, %arg3: memref<1x4x16xf32, #tpu.memory_space<vmem>>, %arg4: memref<1x4x16xf32, #tpu.memory_space<vmem>>, %arg5: memref<8x28xf32, #tpu.memory_space<vmem>>, %arg6: memref<8x1xf32, #tpu.memory_space<vmem>>, %arg7: memref<8x1xf32, #tpu.memory_space<vmem>>, %arg8: memref<8x56xf32, #tpu.memory_space<vmem>>, %arg9: memref<8x1xf32, #tpu.memory_space<vmem>>, %arg10: memref<8x1xf32, #tpu.memory_space<vmem>>, %arg11: memref<1x8x16xf32, #tpu.memory_space<vmem>>) attributes {dimension_semantics = [#tpu.dimension_semantics<parallel>, #tpu.dimension_semantics<parallel>], iteration_bounds = array<i64: 2, 1>, scalar_prefetch = 0 : i64, scratch_operands = 0 : i64, tpu.core_type = #tpu.core_type<tc>, window_params = [{transform_indices = @transform_0, window_bounds = array<i64: 1, 4, 16>}, {transform_indices = @transform_1, window_bounds = array<i64: 1, 4, 16>}, {transform_indices = @transform_2, window_bounds = array<i64: 1, 4, 16>}, {pipeline_mode = #tpu.pipeline_mode<synchronous>, transform_indices = @transform_3, window_bounds = array<i64: 8, 28>}, {pipeline_mode = #tpu.pipeline_mode<synchronous>, transform_indices = @transform_4, window_bounds = array<i64: 8, 1>}, {pipeline_mode = #tpu.pipeline_mode<synchronous>, transform_indices = @transform_5, window_bounds = array<i64: 8, 1>}, {pipeline_mode = #tpu.pipeline_mode<synchronous>, transform_indices = @transform_6, window_bounds = array<i64: 8, 56>}, {pipeline_mode = #tpu.pipeline_mode<synchronous>, transform_indices = @transform_7, window_bounds = array<i64: 8, 1>}, {pipeline_mode = #tpu.pipeline_mode<synchronous>, transform_indices = @transform_8, window_bounds = array<i64: 8, 1>}, {transform_indices = @transform_9, window_bounds = array<i64: 1, 8, 16>}]} {
    %c16_i32 = arith.constant 16 : i32
    %0 = arith.muli %arg1, %c16_i32 : i32
    %c0 = arith.constant 0 : index
    %c0_0 = arith.constant 0 : index
    %c0_1 = arith.constant 0 : index
    %1 = vector.load %arg2[%c0, %c0_0, %c0_1] : memref<1x4x16xf32, #tpu.memory_space<vmem>>, vector<1x4x16xf32>
    %2 = vector.shape_cast %1 : vector<1x4x16xf32> to vector<4x16xf32>
    %c0_2 = arith.constant 0 : index
    %c0_3 = arith.constant 0 : index
    %c0_4 = arith.constant 0 : index
    %3 = vector.load %arg3[%c0_2, %c0_3, %c0_4] : memref<1x4x16xf32, #tpu.memory_space<vmem>>, vector<1x4x16xf32>
    %4 = vector.shape_cast %3 : vector<1x4x16xf32> to vector<4x16xf32>
    %c0_5 = arith.constant 0 : index
    %c0_6 = arith.constant 0 : index
    %c0_7 = arith.constant 0 : index
    %5 = vector.load %arg4[%c0_5, %c0_6, %c0_7] : memref<1x4x16xf32, #tpu.memory_space<vmem>>, vector<1x4x16xf32>
    %6 = vector.shape_cast %5 : vector<1x4x16xf32> to vector<4x16xf32>
    %7 = vector.extract_strided_slice %2 {offsets = [0, 10], sizes = [4, 6], strides = [1, 1]} : vector<4x16xf32> to vector<4x6xf32>
    %8 = vector.extract_strided_slice %6 {offsets = [0, 0], sizes = [4, 6], strides = [1, 1]} : vector<4x16xf32> to vector<4x6xf32>
    %9 = tpu.concatenate %7, %4, %8 in 1 : vector<4x6xf32>, vector<4x16xf32>, vector<4x6xf32> -> vector<4x28xf32>
    %c6_i32 = arith.constant 6 : i32
    %10 = arith.subi %0, %c6_i32 : i32
    %11 = tpu.iota {dimensions = array<i32: 1>} : vector<4x28xi32>
    %12 = vector.broadcast %10 : i32 to vector<4x28xi32>
    %13 = arith.addi %12, %11 : vector<4x28xi32>
    %c0_i32 = arith.constant 0 : i32
    %14 = vector.broadcast %c0_i32 : i32 to vector<4x28xi32>
    %15 = arith.cmpi sge, %13, %14 : vector<4x28xi32>
    %c16_i32_8 = arith.constant 16 : i32
    %16 = vector.broadcast %c16_i32_8 : i32 to vector<4x28xi32>
    %17 = arith.cmpi slt, %13, %16 : vector<4x28xi32>
    %18 = arith.andi %15, %17 : vector<4x28xi1>
    %cst = arith.constant 0.000000e+00 : f32
    %19 = vector.broadcast %cst : f32 to vector<4x28xf32>
    %20 = arith.select %18, %9, %19 : vector<4x28xi1>, vector<4x28xf32>
    %21 = vector.extract_strided_slice %20 {offsets = [0, 0], sizes = [4, 22], strides = [1, 1]} : vector<4x28xf32> to vector<4x22xf32>
    %22 = vector.extract_strided_slice %20 {offsets = [0, 1], sizes = [4, 22], strides = [1, 1]} : vector<4x28xf32> to vector<4x22xf32>
    %23 = vector.extract_strided_slice %20 {offsets = [0, 2], sizes = [4, 22], strides = [1, 1]} : vector<4x28xf32> to vector<4x22xf32>
    %24 = vector.extract_strided_slice %20 {offsets = [0, 3], sizes = [4, 22], strides = [1, 1]} : vector<4x28xf32> to vector<4x22xf32>
    %25 = vector.extract_strided_slice %20 {offsets = [0, 4], sizes = [4, 22], strides = [1, 1]} : vector<4x28xf32> to vector<4x22xf32>
    %26 = vector.extract_strided_slice %20 {offsets = [0, 5], sizes = [4, 22], strides = [1, 1]} : vector<4x28xf32> to vector<4x22xf32>
    %27 = vector.extract_strided_slice %20 {offsets = [0, 6], sizes = [4, 22], strides = [1, 1]} : vector<4x28xf32> to vector<4x22xf32>
    %28 = tpu.concatenate %21, %22, %23, %24, %25, %26, %27 in 0 : vector<4x22xf32>, vector<4x22xf32>, vector<4x22xf32>, vector<4x22xf32>, vector<4x22xf32>, vector<4x22xf32>, vector<4x22xf32> -> vector<28x22xf32>
    %c0_9 = arith.constant 0 : index
    %c0_10 = arith.constant 0 : index
    %29 = vector.load %arg5[%c0_9, %c0_10] : memref<8x28xf32, #tpu.memory_space<vmem>>, vector<8x28xf32>
    %cst_11 = arith.constant dense<0.000000e+00> : vector<8x22xf32>
    %30 = tpu.matmul %29, %28, %cst_11 {dimension_numbers = #tpu.dot_dimension_numbers<[1], [0], [0], [1], [0, 0, 1, 1], [], []>} : vector<8x28xf32>, vector<28x22xf32>, vector<8x22xf32> -> vector<8x22xf32>
    %c0_12 = arith.constant 0 : index
    %c0_13 = arith.constant 0 : index
    %31 = vector.load %arg6[%c0_12, %c0_13] : memref<8x1xf32, #tpu.memory_space<vmem>>, vector<8x1xf32>
    %32 = vector.broadcast %31 : vector<8x1xf32> to vector<8x22xf32>
    %33 = arith.mulf %30, %32 : vector<8x22xf32>
    %c0_14 = arith.constant 0 : index
    %c0_15 = arith.constant 0 : index
    %34 = vector.load %arg7[%c0_14, %c0_15] : memref<8x1xf32, #tpu.memory_space<vmem>>, vector<8x1xf32>
    %35 = vector.broadcast %34 : vector<8x1xf32> to vector<8x22xf32>
    %36 = arith.addf %33, %35 : vector<8x22xf32>
    %cst_16 = arith.constant 0.000000e+00 : f32
    %37 = vector.broadcast %cst_16 : f32 to vector<8x22xf32>
    %38 = arith.maximumf %36, %37 : vector<8x22xf32>
    %c3_i32 = arith.constant 3 : i32
    %39 = arith.subi %0, %c3_i32 : i32
    %40 = tpu.iota {dimensions = array<i32: 1>} : vector<8x22xi32>
    %41 = vector.broadcast %39 : i32 to vector<8x22xi32>
    %42 = arith.addi %41, %40 : vector<8x22xi32>
    %c0_i32_17 = arith.constant 0 : i32
    %43 = vector.broadcast %c0_i32_17 : i32 to vector<8x22xi32>
    %44 = arith.cmpi sge, %42, %43 : vector<8x22xi32>
    %c16_i32_18 = arith.constant 16 : i32
    %45 = vector.broadcast %c16_i32_18 : i32 to vector<8x22xi32>
    %46 = arith.cmpi slt, %42, %45 : vector<8x22xi32>
    %47 = arith.andi %44, %46 : vector<8x22xi1>
    %cst_19 = arith.constant 0.000000e+00 : f32
    %48 = vector.broadcast %cst_19 : f32 to vector<8x22xf32>
    %49 = arith.select %47, %38, %48 : vector<8x22xi1>, vector<8x22xf32>
    %50 = vector.extract_strided_slice %49 {offsets = [0, 0], sizes = [8, 16], strides = [1, 1]} : vector<8x22xf32> to vector<8x16xf32>
    %51 = vector.extract_strided_slice %49 {offsets = [0, 1], sizes = [8, 16], strides = [1, 1]} : vector<8x22xf32> to vector<8x16xf32>
    %52 = vector.extract_strided_slice %49 {offsets = [0, 2], sizes = [8, 16], strides = [1, 1]} : vector<8x22xf32> to vector<8x16xf32>
    %53 = vector.extract_strided_slice %49 {offsets = [0, 3], sizes = [8, 16], strides = [1, 1]} : vector<8x22xf32> to vector<8x16xf32>
    %54 = vector.extract_strided_slice %49 {offsets = [0, 4], sizes = [8, 16], strides = [1, 1]} : vector<8x22xf32> to vector<8x16xf32>
    %55 = vector.extract_strided_slice %49 {offsets = [0, 5], sizes = [8, 16], strides = [1, 1]} : vector<8x22xf32> to vector<8x16xf32>
    %56 = vector.extract_strided_slice %49 {offsets = [0, 6], sizes = [8, 16], strides = [1, 1]} : vector<8x22xf32> to vector<8x16xf32>
    %57 = tpu.concatenate %50, %51, %52, %53, %54, %55, %56 in 0 : vector<8x16xf32>, vector<8x16xf32>, vector<8x16xf32>, vector<8x16xf32>, vector<8x16xf32>, vector<8x16xf32>, vector<8x16xf32> -> vector<56x16xf32>
    %c0_20 = arith.constant 0 : index
    %c0_21 = arith.constant 0 : index
    %58 = vector.load %arg8[%c0_20, %c0_21] : memref<8x56xf32, #tpu.memory_space<vmem>>, vector<8x56xf32>
    %cst_22 = arith.constant dense<0.000000e+00> : vector<8x16xf32>
    %59 = tpu.matmul %58, %57, %cst_22 {dimension_numbers = #tpu.dot_dimension_numbers<[1], [0], [0], [1], [0, 0, 1, 1], [], []>} : vector<8x56xf32>, vector<56x16xf32>, vector<8x16xf32> -> vector<8x16xf32>
    %c0_23 = arith.constant 0 : index
    %c0_24 = arith.constant 0 : index
    %60 = vector.load %arg9[%c0_23, %c0_24] : memref<8x1xf32, #tpu.memory_space<vmem>>, vector<8x1xf32>
    %61 = vector.broadcast %60 : vector<8x1xf32> to vector<8x16xf32>
    %62 = arith.mulf %59, %61 : vector<8x16xf32>
    %c0_25 = arith.constant 0 : index
    %c0_26 = arith.constant 0 : index
    %63 = vector.load %arg10[%c0_25, %c0_26] : memref<8x1xf32, #tpu.memory_space<vmem>>, vector<8x1xf32>
    %64 = vector.broadcast %63 : vector<8x1xf32> to vector<8x16xf32>
    %65 = arith.addf %62, %64 : vector<8x16xf32>
    %cst_27 = arith.constant 0.000000e+00 : f32
    %66 = vector.broadcast %cst_27 : f32 to vector<8x16xf32>
    %67 = arith.maximumf %65, %66 : vector<8x16xf32>
    %c0_28 = arith.constant 0 : index
    %c0_29 = arith.constant 0 : index
    %c0_30 = arith.constant 0 : index
    %68 = vector.load %arg11[%c0_28, %c0_29, %c0_30] : memref<1x8x16xf32, #tpu.memory_space<vmem>>, vector<1x8x16xf32>
    %69 = vector.shape_cast %68 : vector<1x8x16xf32> to vector<8x16xf32>
    %70 = vector.shape_cast %67 : vector<8x16xf32> to vector<1x8x16xf32>
    tpu.vector_store %arg11[%c0_28, %c0_29, %c0_30], %70 {strides = array<i32>} : memref<1x8x16xf32, #tpu.memory_space<vmem>>, vector<1x8x16xf32>,
    return
  }
  func.func @transform_0(%arg0: i32, %arg1: i32) -> (i32, i32, i32) {
    %c1_i32 = arith.constant 1 : i32
    %0 = arith.subi %arg1, %c1_i32 : i32
    %c0_i32 = arith.constant 0 : i32
    %1 = arith.maxsi %0, %c0_i32 : i32
    %c0_i32_0 = arith.constant 0 : i32
    %c0_i32_1 = arith.constant 0 : i32
    return %arg0, %c0_i32_0, %1 : i32, i32, i32
  }
  func.func @transform_1(%arg0: i32, %arg1: i32) -> (i32, i32, i32) {
    %c0_i32 = arith.constant 0 : i32
    %c0_i32_0 = arith.constant 0 : i32
    return %arg0, %c0_i32, %arg1 : i32, i32, i32
  }
  func.func @transform_2(%arg0: i32, %arg1: i32) -> (i32, i32, i32) {
    %c1_i32 = arith.constant 1 : i32
    %0 = arith.addi %arg1, %c1_i32 : i32
    %c0_i32 = arith.constant 0 : i32
    %1 = arith.minsi %0, %c0_i32 : i32
    %c0_i32_0 = arith.constant 0 : i32
    %c0_i32_1 = arith.constant 0 : i32
    return %arg0, %c0_i32_0, %1 : i32, i32, i32
  }
  func.func @transform_3(%arg0: i32, %arg1: i32) -> (i32, i32) {
    %c0_i32 = arith.constant 0 : i32
    %c0_i32_0 = arith.constant 0 : i32
    %c0_i32_1 = arith.constant 0 : i32
    return %c0_i32, %c0_i32_0 : i32, i32
  }
  func.func @transform_4(%arg0: i32, %arg1: i32) -> (i32, i32) {
    %c0_i32 = arith.constant 0 : i32
    %c0_i32_0 = arith.constant 0 : i32
    %c0_i32_1 = arith.constant 0 : i32
    return %c0_i32, %c0_i32_0 : i32, i32
  }
  func.func @transform_5(%arg0: i32, %arg1: i32) -> (i32, i32) {
    %c0_i32 = arith.constant 0 : i32
    %c0_i32_0 = arith.constant 0 : i32
    %c0_i32_1 = arith.constant 0 : i32
    return %c0_i32, %c0_i32_0 : i32, i32
  }
  func.func @transform_6(%arg0: i32, %arg1: i32) -> (i32, i32) {
    %c0_i32 = arith.constant 0 : i32
    %c0_i32_0 = arith.constant 0 : i32
    %c0_i32_1 = arith.constant 0 : i32
    return %c0_i32, %c0_i32_0 : i32, i32
  }
  func.func @transform_7(%arg0: i32, %arg1: i32) -> (i32, i32) {
    %c0_i32 = arith.constant 0 : i32
    %c0_i32_0 = arith.constant 0 : i32
    %c0_i32_1 = arith.constant 0 : i32
    return %c0_i32, %c0_i32_0 : i32, i32
  }
  func.func @transform_8(%arg0: i32, %arg1: i32) -> (i32, i32) {
    %c0_i32 = arith.constant 0 : i32
    %c0_i32_0 = arith.constant 0 : i32
    %c0_i32_1 = arith.constant 0 : i32
    return %c0_i32, %c0_i32_0 : i32, i32
  }
  func.func @transform_9(%arg0: i32, %arg1: i32) -> (i32, i32, i32) {
    %c0_i32 = arith.constant 0 : i32
    %c0_i32_0 = arith.constant 0 : i32
    return %arg0, %c0_i32, %arg1 : i32, i32, i32
  }
}

</mosaic_0001>

<llo_original>
// kernel: tpu_custom_call.1
$region0: #{tpu_custom_call.1}
  #allocation0 [shape = 'u32[]', space=smem, size = 0x4, offset = 0x4, fixed_abs, tag = 'smem constant byte address 0x4 - core index']
  #allocation1 [shape = 'u32[144,128]{1,0:T(1,128)}', space=vmem, size = 0x12000, scoped, tag = 'internal scratch']
  %s0 = inlined_call_operand.vmem [shape: f32[2,4,16], index: 0, kind: input, shape index: {}]
  %s1 = inlined_call_operand.vmem [shape: f32[2,4,16], index: 1, kind: input, shape index: {}]
  %s2 = inlined_call_operand.vmem [shape: f32[2,4,16], index: 2, kind: input, shape index: {}]
  %s3 = inlined_call_operand.vmem [shape: f32[8,28], index: 3, kind: input, shape index: {}]
  %s4 = inlined_call_operand.vmem [shape: f32[8,1], index: 4, kind: input, shape index: {}]
  %s5 = inlined_call_operand.vmem [shape: f32[8,1], index: 5, kind: input, shape index: {}]
  %s6 = inlined_call_operand.vmem [shape: f32[8,56], index: 6, kind: input, shape index: {}]
  %s7 = inlined_call_operand.vmem [shape: f32[8,1], index: 7, kind: input, shape index: {}]
  %s8 = inlined_call_operand.vmem [shape: f32[8,1], index: 8, kind: input, shape index: {}]
  %s9 = inlined_call_operand.hbm [shape: f32[2,8,16], index: 9, kind: output, shape index: {}]
  %s10 = sld [smem:[#allocation0]]
  $region69: #{tpu_custom_call.1} parent=0
    _
  %s12 = ssub.s32 1, %s10
  %s13 = scalar_select 0, %s12, %s10
  $region1: #{tpu_custom_call.1} parent=0
    #allocation2 [shape = 'u8[8192]{0}', space=vmem, size = 0x2000, scoped, tag = 'output window, operand 0']
    #allocation3 [shape = 's32[2]{0}', space=sflag, size = 0x8, scoped, tag = 'scoped memory for tpu_custom_call.1']
    %14 = vsyncpa [#allocation3], 0
    %s15 = scalar_lea.sflag [#allocation3], 1
    %16 = vsyncpa %s15, 0
    loop: start=0, step=1, limit=4
    $region2: #{tpu_custom_call.1} parent=1 // loop_pre_header
      _
    $region3: #{tpu_custom_call.1} parent=1 // loop_header
      %s18 = sphi 0, %s22
      %p19 = scmp.ge.s32.totalorder %s18, 4
      %s25 = sphi 0, %s37
      %s26 = sphi 0, %s33
      %s27 = sphi 0, %s25
      %s28 = sphi 0, %s26
      %s29 = sphi 0, %s27
      %s30 = sphi 0, %s28
      %s48 = sphi 0, %s50
      %s51 = sphi 0, %s48
      %s52 = sphi 0, %s51
      %s68 = sphi 0, %s52
      %s76 = sphi 0, %s78
      %s79 = sphi 0, %s76
      %s80 = sphi 0, %s79
      %s96 = sphi 0, %s80
      %s110 = sphi 0, %s112
      %s113 = sphi 0, %s110
      %s114 = sphi 0, %s113
      %s130 = sphi 0, %s114
      %s134 = sphi 0, %s134
      %s136 = sphi 0, %s134
      %s137 = sphi 0, %s136
      %s151 = sphi 0, %s137
      %s155 = sphi 0, %s155
      %s157 = sphi 0, %s155
      %s158 = sphi 0, %s157
      %s172 = sphi 0, %s158
      %s176 = sphi 0, %s176
      %s178 = sphi 0, %s176
      %s179 = sphi 0, %s178
      %s193 = sphi 0, %s179
      %s197 = sphi 0, %s197
      %s199 = sphi 0, %s197
      %s200 = sphi 0, %s199
      %s214 = sphi 0, %s200
      %s218 = sphi 0, %s218
      %s220 = sphi 0, %s218
      %s221 = sphi 0, %s220
      %s235 = sphi 0, %s221
      %s239 = sphi 0, %s239
      %s241 = sphi 0, %s239
      %s242 = sphi 0, %s241
      %s256 = sphi 0, %s242
      %s264 = sphi 0, %s266
      %s267 = sphi 0, %s264
      %s268 = sphi 0, %s267
      %s284 = sphi 0, %s268
    $region4: #{tpu_custom_call.1} parent=1 // loop_header_branch
      %21 = sbr.rel (%p19) target = $region8
    $region5: #{tpu_custom_call.1} parent=1 // loop_body
      %s23 = ssub.s32 %s18, 1
      %s24 = ssub.s32 %s18, 2
      %s31 = sadd.s32 1, %s26
      %p32 = scmp.ge.s32.totalorder %s31, 1
      %s33 = scalar_select %p32, 0, %s31
      %s34 = sadd.s32 1, %s25
      %s35 = scalar_select %p32, %s34, %s25
      %p36 = scmp.ge.s32.totalorder %s35, 2
      %s37 = scalar_select %p36, 0, %s35
      %s38 = ssub.s32 %s26, 1
      %p39 = scmp.gt.s32.totalorder %s38, 0
      %s40 = scalar_select %p39, %s38, 0
      %s41 = ssub.s32 %s33, 1
      %p42 = scmp.gt.s32.totalorder %s41, 0
      %s43 = scalar_select %p42, %s41, 0
      %s44 = ssub.s32 %s25, %s37
      %s45 = ssub.s32 %s40, %s43
      %s46 = sor.u32 %s44, %s45
      %p47 = scmp.eq.s32.totalorder %s46, 0
      %s49 = sadd.s32 %s48, 1
      %s50 = scalar_select %p47, %s48, %s49
      %p53 = pneg %p47
      %p54 = scmp.eq.s32.totalorder %s18, 1
      %p55 = por %p53, %p54
      %p56 = scmp.ne.s32.totalorder %s48, %s51
      %p57 = scmp.eq.s32.totalorder %s18, 0
      %p58 = por %p56, %p57
      %p59 = scmp.ne.s32.totalorder %s48, %s51
      %p60 = scmp.eq.s32.totalorder %s23, 1
      %p61 = por %p59, %p60
      %p62 = scmp.ne.s32.totalorder %s51, %s52
      %p63 = scmp.eq.s32.totalorder %s23, 0
      %p64 = por %p62, %p63
      %p65 = scmp.ne.s32.totalorder %s51, %s52
      %p66 = scmp.eq.s32.totalorder %s24, 1
      %p67 = por %p65, %p66
      %p69 = scmp.ne.s32.totalorder %s52, %s68
      %p70 = scmp.eq.s32.totalorder %s24, 0
      %p71 = por %p69, %p70
      %s72 = ssub.s32 %s25, %s37
      %s73 = ssub.s32 %s26, %s33
      %s74 = sor.u32 %s72, %s73
      %p75 = scmp.eq.s32.totalorder %s74, 0
      %s77 = sadd.s32 %s76, 1
      %s78 = scalar_select %p75, %s76, %s77
      %p81 = pneg %p75
      %p82 = scmp.eq.s32.totalorder %s18, 1
      %p83 = por %p81, %p82
      %p84 = scmp.ne.s32.totalorder %s76, %s79
      %p85 = scmp.eq.s32.totalorder %s18, 0
      %p86 = por %p84, %p85
      %p87 = scmp.ne.s32.totalorder %s76, %s79
      %p88 = scmp.eq.s32.totalorder %s23, 1
      %p89 = por %p87, %p88
      %p90 = scmp.ne.s32.totalorder %s79, %s80
      %p91 = scmp.eq.s32.totalorder %s23, 0
      %p92 = por %p90, %p91
      %p93 = scmp.ne.s32.totalorder %s79, %s80
      %p94 = scmp.eq.s32.totalorder %s24, 1
      %p95 = por %p93, %p94
      %p97 = scmp.ne.s32.totalorder %s80, %s96
      %p98 = scmp.eq.s32.totalorder %s24, 0
      %p99 = por %p97, %p98
      %s100 = sadd.s32 %s26, 1
      %p101 = scmp.lt.s32.totalorder %s100, 0
      %s102 = scalar_select %p101, %s100, 0
      %s103 = sadd.s32 %s33, 1
      %p104 = scmp.lt.s32.totalorder %s103, 0
      %s105 = scalar_select %p104, %s103, 0
      %s106 = ssub.s32 %s25, %s37
      %s107 = ssub.s32 %s102, %s105
      %s108 = sor.u32 %s106, %s107
      %p109 = scmp.eq.s32.totalorder %s108, 0
      %s111 = sadd.s32 %s110, 1
      %s112 = scalar_select %p109, %s110, %s111
      %p115 = pneg %p109
      %p116 = scmp.eq.s32.totalorder %s18, 1
      %p117 = por %p115, %p116
      %p118 = scmp.ne.s32.totalorder %s110, %s113
      %p119 = scmp.eq.s32.totalorder %s18, 0
      %p120 = por %p118, %p119
      %p121 = scmp.ne.s32.totalorder %s110, %s113
      %p122 = scmp.eq.s32.totalorder %s23, 1
      %p123 = por %p121, %p122
      %p124 = scmp.ne.s32.totalorder %s113, %s114
      %p125 = scmp.eq.s32.totalorder %s23, 0
      %p126 = por %p124, %p125
      %p127 = scmp.ne.s32.totalorder %s113, %s114
      %p128 = scmp.eq.s32.totalorder %s24, 1
      %p129 = por %p127, %p128
      %p131 = scmp.ne.s32.totalorder %s114, %s130
      %p132 = scmp.eq.s32.totalorder %s24, 0
      %p133 = por %p131, %p132
      %s135 = sadd.s32 %s134, 1
      %p138 = scmp.eq.s32.totalorder %s18, 1
      %p139 = scmp.ne.s32.totalorder %s134, %s136
      %p140 = scmp.eq.s32.totalorder %s18, 0
      %p141 = por %p139, %p140
      %p142 = scmp.ne.s32.totalorder %s134, %s136
      %p143 = scmp.eq.s32.totalorder %s23, 1
      %p144 = por %p142, %p143
      %p145 = scmp.ne.s32.totalorder %s136, %s137
      %p146 = scmp.eq.s32.totalorder %s23, 0
      %p147 = por %p145, %p146
      %p148 = scmp.ne.s32.totalorder %s136, %s137
      %p149 = scmp.eq.s32.totalorder %s24, 1
      %p150 = por %p148, %p149
      %p152 = scmp.ne.s32.totalorder %s137, %s151
      %p153 = scmp.eq.s32.totalorder %s24, 0
      %p154 = por %p152, %p153
      %s156 = sadd.s32 %s155, 1
      %p159 = scmp.eq.s32.totalorder %s18, 1
      %p160 = scmp.ne.s32.totalorder %s155, %s157
      %p161 = scmp.eq.s32.totalorder %s18, 0
      %p162 = por %p160, %p161
      %p163 = scmp.ne.s32.totalorder %s155, %s157
      %p164 = scmp.eq.s32.totalorder %s23, 1
      %p165 = por %p163, %p164
      %p166 = scmp.ne.s32.totalorder %s157, %s158
      %p167 = scmp.eq.s32.totalorder %s23, 0
      %p168 = por %p166, %p167
      %p169 = scmp.ne.s32.totalorder %s157, %s158
      %p170 = scmp.eq.s32.totalorder %s24, 1
      %p171 = por %p169, %p170
      %p173 = scmp.ne.s32.totalorder %s158, %s172
      %p174 = scmp.eq.s32.totalorder %s24, 0
      %p175 = por %p173, %p174
      %s177 = sadd.s32 %s176, 1
      %p180 = scmp.eq.s32.totalorder %s18, 1
      %p181 = scmp.ne.s32.totalorder %s176, %s178
      %p182 = scmp.eq.s32.totalorder %s18, 0
      %p183 = por %p181, %p182
      %p184 = scmp.ne.s32.totalorder %s176, %s178
      %p185 = scmp.eq.s32.totalorder %s23, 1
      %p186 = por %p184, %p185
      %p187 = scmp.ne.s32.totalorder %s178, %s179
      %p188 = scmp.eq.s32.totalorder %s23, 0
      %p189 = por %p187, %p188
      %p190 = scmp.ne.s32.totalorder %s178, %s179
      %p191 = scmp.eq.s32.totalorder %s24, 1
      %p192 = por %p190, %p191
      %p194 = scmp.ne.s32.totalorder %s179, %s193
      %p195 = scmp.eq.s32.totalorder %s24, 0
      %p196 = por %p194, %p195
      %s198 = sadd.s32 %s197, 1
      %p201 = scmp.eq.s32.totalorder %s18, 1
      %p202 = scmp.ne.s32.totalorder %s197, %s199
      %p203 = scmp.eq.s32.totalorder %s18, 0
      %p204 = por %p202, %p203
      %p205 = scmp.ne.s32.totalorder %s197, %s199
      %p206 = scmp.eq.s32.totalorder %s23, 1
      %p207 = por %p205, %p206
      %p208 = scmp.ne.s32.totalorder %s199, %s200
      %p209 = scmp.eq.s32.totalorder %s23, 0
      %p210 = por %p208, %p209
      %p211 = scmp.ne.s32.totalorder %s199, %s200
      %p212 = scmp.eq.s32.totalorder %s24, 1
      %p213 = por %p211, %p212
      %p215 = scmp.ne.s32.totalorder %s200, %s214
      %p216 = scmp.eq.s32.totalorder %s24, 0
      %p217 = por %p215, %p216
      %s219 = sadd.s32 %s218, 1
      %p222 = scmp.eq.s32.totalorder %s18, 1
      %p223 = scmp.ne.s32.totalorder %s218, %s220
      %p224 = scmp.eq.s32.totalorder %s18, 0
      %p225 = por %p223, %p224
      %p226 = scmp.ne.s32.totalorder %s218, %s220
      %p227 = scmp.eq.s32.totalorder %s23, 1
      %p228 = por %p226, %p227
      %p229 = scmp.ne.s32.totalorder %s220, %s221
      %p230 = scmp.eq.s32.totalorder %s23, 0
      %p231 = por %p229, %p230
      %p232 = scmp.ne.s32.totalorder %s220, %s221
      %p233 = scmp.eq.s32.totalorder %s24, 1
      %p234 = por %p232, %p233
      %p236 = scmp.ne.s32.totalorder %s221, %s235
      %p237 = scmp.eq.s32.totalorder %s24, 0
      %p238 = por %p236, %p237
      %s240 = sadd.s32 %s239, 1
      %p243 = scmp.eq.s32.totalorder %s18, 1
      %p244 = scmp.ne.s32.totalorder %s239, %s241
      %p245 = scmp.eq.s32.totalorder %s18, 0
      %p246 = por %p244, %p245
      %p247 = scmp.ne.s32.totalorder %s239, %s241
      %p248 = scmp.eq.s32.totalorder %s23, 1
      %p249 = por %p247, %p248
      %p250 = scmp.ne.s32.totalorder %s241, %s242
      %p251 = scmp.eq.s32.totalorder %s23, 0
      %p252 = por %p250, %p251
      %p253 = scmp.ne.s32.totalorder %s241, %s242
      %p254 = scmp.eq.s32.totalorder %s24, 1
      %p255 = por %p253, %p254
      %p257 = scmp.ne.s32.totalorder %s242, %s256
      %p258 = scmp.eq.s32.totalorder %s24, 0
      %p259 = por %p257, %p258
      %s260 = ssub.s32 %s25, %s37
      %s261 = ssub.s32 %s26, %s33
      %s262 = sor.u32 %s260, %s261
      %p263 = scmp.eq.s32.totalorder %s262, 0
      %s265 = sadd.s32 %s264, 1
      %s266 = scalar_select %p263, %s264, %s265
      %p269 = pneg %p263
      %p270 = scmp.eq.s32.totalorder %s18, 1
      %p271 = por %p269, %p270
      %p272 = scmp.ne.s32.totalorder %s264, %s267
      %p273 = scmp.eq.s32.totalorder %s18, 0
      %p274 = por %p272, %p273
      %p275 = scmp.ne.s32.totalorder %s264, %s267
      %p276 = scmp.eq.s32.totalorder %s23, 1
      %p277 = por %p275, %p276
      %p278 = scmp.ne.s32.totalorder %s267, %s268
      %p279 = scmp.eq.s32.totalorder %s23, 0
      %p280 = por %p278, %p279
      %p281 = scmp.ne.s32.totalorder %s267, %s268
      %p282 = scmp.eq.s32.totalorder %s24, 1
      %p283 = por %p281, %p282
      %p285 = scmp.ne.s32.totalorder %s268, %s284
      %p286 = scmp.eq.s32.totalorder %s24, 0
      %p287 = por %p285, %p286
      %p288 = scmp.le.s32.totalorder 1, %s18
      %p289 = scmp.lt.s32.totalorder %s18, 3
      %p290 = pnand %p288, %p289
      %p291 = pneg %p290
      // Predicated region
      $region9: #{tpu_custom_call.1} parent=5 // pred_check
        _
      $region10: #{tpu_custom_call.1} parent=5 // pred_check_branch
        %293 = sbr.rel (%p290) target = $region12
      $region11: #{tpu_custom_call.1} parent=5 // pred_region
        %s294 = ssub.s32 %s18, 1
        // Predicated region
        $region13: #{tpu_custom_call.1} parent=11 // pred_check
          %p295 = pneg %p147
        $region14: #{tpu_custom_call.1} parent=11 // pred_check_branch
          %297 = sbr.rel (%p295) target = $region16
        $region15: #{tpu_custom_call.1} parent=11 // pred_region
          _
        $region16: #{tpu_custom_call.1} parent=11 // pred_fallthru
          _
        // Predicated region
        $region17: #{tpu_custom_call.1} parent=11 // pred_check
          %p298 = pneg %p168
        $region18: #{tpu_custom_call.1} parent=11 // pred_check_branch
          %300 = sbr.rel (%p298) target = $region20
        $region19: #{tpu_custom_call.1} parent=11 // pred_region
          _
        $region20: #{tpu_custom_call.1} parent=11 // pred_fallthru
          _
        // Predicated region
        $region21: #{tpu_custom_call.1} parent=11 // pred_check
          %p301 = pneg %p189
        $region22: #{tpu_custom_call.1} parent=11 // pred_check_branch
          %303 = sbr.rel (%p301) target = $region24
        $region23: #{tpu_custom_call.1} parent=11 // pred_region
          _
        $region24: #{tpu_custom_call.1} parent=11 // pred_fallthru
          _
        // Predicated region
        $region25: #{tpu_custom_call.1} parent=11 // pred_check
          %p304 = pneg %p210
        $region26: #{tpu_custom_call.1} parent=11 // pred_check_branch
          %306 = sbr.rel (%p304) target = $region28
        $region27: #{tpu_custom_call.1} parent=11 // pred_region
          _
        $region28: #{tpu_custom_call.1} parent=11 // pred_fallthru
          _
        // Predicated region
        $region29: #{tpu_custom_call.1} parent=11 // pred_check
          %p307 = pneg %p231
        $region30: #{tpu_custom_call.1} parent=11 // pred_check_branch
          %309 = sbr.rel (%p307) target = $region32
        $region31: #{tpu_custom_call.1} parent=11 // pred_region
          _
        $region32: #{tpu_custom_call.1} parent=11 // pred_fallthru
          _
        // Predicated region
        $region33: #{tpu_custom_call.1} parent=11 // pred_check
          %p310 = pneg %p252
        $region34: #{tpu_custom_call.1} parent=11 // pred_check_branch
          %312 = sbr.rel (%p310) target = $region36
        $region35: #{tpu_custom_call.1} parent=11 // pred_region
          _
        $region36: #{tpu_custom_call.1} parent=11 // pred_fallthru
          _
      $region12: #{tpu_custom_call.1} parent=5 // pred_fallthru
        _
      %p313 = scmp.lt.s32.totalorder %s18, 2
      // Predicated region
      $region37: #{tpu_custom_call.1} parent=5 // pred_check
        %p314 = pneg %p313
      $region38: #{tpu_custom_call.1} parent=5 // pred_check_branch
        %316 = sbr.rel (%p314) target = $region40
      $region39: #{tpu_custom_call.1} parent=5 // pred_region
        // Predicated region
        $region41: #{tpu_custom_call.1} parent=39 // pred_check
          %p317 = pneg %p58
        $region42: #{tpu_custom_call.1} parent=39 // pred_check_branch
          %319 = sbr.rel (%p317) target = $region44
        $region43: #{tpu_custom_call.1} parent=39 // pred_region
          %s320 = ssub.s32 %s26, 1
          %p321 = scmp.gt.s32.totalorder %s320, 0
          %s322 = scalar_select %p321, %s320, 0
          %p323 = scmp.lt.s32.totalorder %s25, 1
          %s324 = scalar_select %p323, %s25, 1
          %p325 = scmp.lt.s32.totalorder %s322, 0
          %s326 = scalar_select %p325, %s322, 0
          %s327 = sadd.s32 %s326, %s324
          %s328 = smul.addr %s327, 4
          %s329 = scalar_lea.vmem %s0, %s328
          %s330 = ssub.s32 %s26, 1
          %p331 = scmp.gt.s32.totalorder %s330, 0
          %s332 = scalar_select %p331, %s330, 0
        $region44: #{tpu_custom_call.1} parent=39 // pred_fallthru
          _
        // Predicated region
        $region45: #{tpu_custom_call.1} parent=39 // pred_check
          %p333 = pneg %p86
        $region46: #{tpu_custom_call.1} parent=39 // pred_check_branch
          %335 = sbr.rel (%p333) target = $region48
        $region47: #{tpu_custom_call.1} parent=39 // pred_region
          %p336 = scmp.lt.s32.totalorder %s25, 1
          %s337 = scalar_select %p336, %s25, 1
          %p338 = scmp.lt.s32.totalorder %s26, 0
          %s339 = scalar_select %p338, %s26, 0
          %s340 = sadd.s32 %s339, %s337
          %s341 = smul.addr %s340, 4
          %s342 = scalar_lea.vmem %s1, %s341
        $region48: #{tpu_custom_call.1} parent=39 // pred_fallthru
          _
        // Predicated region
        $region49: #{tpu_custom_call.1} parent=39 // pred_check
          %p343 = pneg %p120
        $region50: #{tpu_custom_call.1} parent=39 // pred_check_branch
          %345 = sbr.rel (%p343) target = $region52
        $region51: #{tpu_custom_call.1} parent=39 // pred_region
          %s346 = sadd.s32 %s26, 1
          %p347 = scmp.lt.s32.totalorder %s346, 0
          %s348 = scalar_select %p347, %s346, 0
          %p349 = scmp.lt.s32.totalorder %s25, 1
          %s350 = scalar_select %p349, %s25, 1
          %p351 = scmp.lt.s32.totalorder %s348, 0
          %s352 = scalar_select %p351, %s348, 0
          %s353 = sadd.s32 %s352, %s350
          %s354 = smul.addr %s353, 4
          %s355 = scalar_lea.vmem %s2, %s354
          %s356 = sadd.s32 %s26, 1
          %p357 = scmp.lt.s32.totalorder %s356, 0
          %s358 = scalar_select %p357, %s356, 0
        $region52: #{tpu_custom_call.1} parent=39 // pred_fallthru
          _
      $region40: #{tpu_custom_call.1} parent=5 // pred_fallthru
        _
      %p359 = scmp.le.s32.totalorder 1, %s18
      %p360 = scmp.lt.s32.totalorder %s18, 3
      %p361 = pnand %p359, %p360
      %p362 = pneg %p361
      // Predicated region
      $region53: #{tpu_custom_call.1} parent=5 // pred_check
        _
      $region54: #{tpu_custom_call.1} parent=5 // pred_check_branch
        %364 = sbr.rel (%p361) target = $region56
      $region55: #{tpu_custom_call.1} parent=5 // pred_region
        %s365 = ssub.s32 %s18, 1
        %s366 = ssub.s32 %s28, 1
        %p367 = scmp.gt.s32.totalorder %s366, 0
        %s368 = scalar_select %p367, %s366, 0
        %p369 = scmp.lt.s32.totalorder %s27, 1
        %s370 = scalar_select %p369, %s27, 1
        %p371 = scmp.lt.s32.totalorder %s368, 0
        %s372 = scalar_select %p371, %s368, 0
        %s373 = sadd.s32 %s372, %s370
        %s374 = smul.addr %s373, 4
        %s375 = scalar_lea.vmem %s0, %s374
        %p376 = pneg %p64
        %p377 = pneg %p61
        %p378 = scmp.lt.s32.totalorder %s27, 1
        %s379 = scalar_select %p378, %s27, 1
        %p380 = scmp.lt.s32.totalorder %s28, 0
        %s381 = scalar_select %p380, %s28, 0
        %s382 = sadd.s32 %s381, %s379
        %s383 = smul.addr %s382, 4
        %s384 = scalar_lea.vmem %s1, %s383
        %p385 = pneg %p92
        %p386 = pneg %p89
        %s387 = sadd.s32 %s28, 1
        %p388 = scmp.lt.s32.totalorder %s387, 0
        %s389 = scalar_select %p388, %s387, 0
        %p390 = scmp.lt.s32.totalorder %s27, 1
        %s391 = scalar_select %p390, %s27, 1
        %p392 = scmp.lt.s32.totalorder %s389, 0
        %s393 = scalar_select %p392, %s389, 0
        %s394 = sadd.s32 %s393, %s391
        %s395 = smul.addr %s394, 4
        %s396 = scalar_lea.vmem %s2, %s395
        %p397 = pneg %p126
        %p398 = pneg %p123
        %p399 = pneg %p147
        %p400 = pneg %p144
        %p401 = pneg %p168
        %p402 = pneg %p165
        %p403 = pneg %p189
        %p404 = pneg %p186
        %p405 = pneg %p210
        %p406 = pneg %p207
        %p407 = pneg %p231
        %p408 = pneg %p228
        %p409 = pneg %p252
        %p410 = pneg %p249
        %p411 = pneg %p280
        %p412 = pneg %p277
        %s413 = sand.u32 %s267, 1
        %s414 = scalar_lea.sflag [#allocation3], %s413
        %s415 = sand.u32 %s267, 1
        %s416 = smul.addr %s415, 8
        %s417 = scalar_lea.vmem [#allocation2], %s416
        %s418 = ssub.s32 %s28, 1
        %p419 = scmp.gt.s32.totalorder %s418, 0
        %s420 = scalar_select %p419, %s418, 0
        %p421 = scmp.lt.s32.totalorder %s27, 1
        %s422 = scalar_select %p421, %s27, 1
        %p423 = scmp.lt.s32.totalorder %s420, 0
        %s424 = scalar_select %p423, %s420, 0
        %s425 = sadd.s32 %s424, %s422
        %s426 = smul.addr %s425, 4
        %s427 = scalar_lea.vmem %s0, %s426
        %s428 = ssub.s32 %s28, 1
        %p429 = scmp.gt.s32.totalorder %s428, 0
        %s430 = scalar_select %p429, %s428, 0
        %p431 = scmp.lt.s32.totalorder %s27, 1
        %s432 = scalar_select %p431, %s27, 1
        %p433 = scmp.lt.s32.totalorder %s28, 0
        %s434 = scalar_select %p433, %s28, 0
        %s435 = sadd.s32 %s434, %s432
        %s436 = smul.addr %s435, 4
        %s437 = scalar_lea.vmem %s1, %s436
        %s438 = sadd.s32 %s28, 1
        %p439 = scmp.lt.s32.totalorder %s438, 0
        %s440 = scalar_select %p439, %s438, 0
        %p441 = scmp.lt.s32.totalorder %s27, 1
        %s442 = scalar_select %p441, %s27, 1
        %p443 = scmp.lt.s32.totalorder %s440, 0
        %s444 = scalar_select %p443, %s440, 0
        %s445 = sadd.s32 %s444, %s442
        %s446 = smul.addr %s445, 4
        %s447 = scalar_lea.vmem %s2, %s446
        %s448 = sadd.s32 %s28, 1
        %p449 = scmp.lt.s32.totalorder %s448, 0
        %s450 = scalar_select %p449, %s448, 0
        %s451 = smul.u32 %s28, 16
        %v452 = vld [vmem:[%s427] sm:$0xf]
        %v453 = vld [vmem:[%s437] sm:$0xf]
        %v454 = vld [vmem:[%s447] sm:$0xf]
        %456 = vrot.lane.b32.xlu0 %v452, 118
        %v457 = vpop.permute.xlu0 %456
        %460 = vrot.lane.b32.xlu0 %v453, 6
        %v461 = vpop.permute.xlu0 %460
        %464 = vrot.lane.b32.xlu0 %v454, 22
        %v465 = vpop.permute.xlu0 %464
        %vm467 = vcmask 48128
        %v468 = vsel %vm467, %v457, %v461
        %vm469 = vcmask 179200
        %v470 = vsel %vm469, %v468, %v465
        %s471 = ssub.s32 %s451, 6
        %v472 = vlaneseq
        %v473 = vand.u32 %v472, 127
        %v474 = vstv %s471
        %v475 = vadd.s32 %v474, %v473
        %vm476 = vcmp.ge.s32.totalorder %v475, 0
        %vm477 = vcmp.lt.s32.totalorder %v475, 16
        %vm478 = vmand %vm476, %vm477
        %v479 = vsel %vm478, %v470, 0.0
        %v481 = vrot.slane %v479, 4
        %482 = vrot.lane.b32.xlu0 %v481, 127
        %v483 = vpop.permute.xlu0 %482
        %485 = vrot.lane.b32.xlu0 %v479, 126
        %v486 = vpop.permute.xlu0 %485
        %488 = vrot.lane.b32.xlu0 %v481, 125
        %v489 = vpop.permute.xlu0 %488
        %491 = vrot.lane.b32.xlu0 %v479, 124
        %v492 = vpop.permute.xlu0 %491
        %494 = vrot.lane.b32.xlu0 %v481, 123
        %v495 = vpop.permute.xlu0 %494
        %497 = vrot.lane.b32.xlu0 %v479, 122
        %v498 = vpop.permute.xlu0 %497
        %vm499 = vcmask 1043456
        %v500 = vsel %vm499, %v479, %v483
        %v501 = vsel %vm499, %v486, %v489
        %v502 = vsel %vm499, %v492, %v495
        %v503 = vld [vmem:[%s3] sm:$0xff]
        %vm504 = vcmask 228352
        %v506 = vsel %vm504, %v503, 0
        %v508 = vsel %vm499, %v498, 0
        %510 = vmatprep.subr.mxu0 0.0
        %511 = vmatpush1.msra.mxu0 %v500
        %512 = vmatprep.subr.mxu0 0.0
        %513 = vmatpush1.msra.mxu0 %v501
        %514 = vmatprep.subr.mxu0 0.0
        %515 = vmatpush1.msra.mxu0 %v502
        %516 = vmatprep.subr.mxu0 0.0
        %517 = vmatpush1.msra.mxu0 %v508
        %518 = vmatprep.subr.mxu0 0.0
        %519 = vmatpush1.msra.mxu0 0.0
        %520 = vmatprep.subr.mxu0 0.0
        %521 = vmatpush1.msra.mxu0 0.0
        %522 = vmatprep.subr.mxu0 0.0
        %523 = vmatpush1.msra.mxu0 0.0
        %524 = vmatprep.subr.mxu0 0.0
        %525 = vmatpush1.msra.mxu0 0.0
        %526 = vmatprep.subr.mxu0 0.0
        %527 = vmatpush1.msra.mxu0 0.0
        %528 = vmatprep.subr.mxu0 0.0
        %529 = vmatpush1.msra.mxu0 0.0
        %530 = vmatprep.subr.mxu0 0.0
        %531 = vmatpush1.msra.mxu0 0.0
        %532 = vmatprep.subr.mxu0 0.0
        %533 = vmatpush1.msra.mxu0 0.0
        %534 = vmatprep.subr.mxu0 0.0
        %535 = vmatpush1.msra.mxu0 0.0
        %536 = vmatprep.subr.mxu0 0.0
        %537 = vmatpush1.msra.mxu0 0.0
        %538 = vmatprep.subr.mxu0 0.0
        %539 = vmatpush1.msra.mxu0 0.0
        %540 = vmatprep.subr.mxu0 0.0
        %541 = vmatpush1.msra.mxu0 0.0
        %542 = vmatprep.subr.mxu0 0.0
        %543 = vmatpush1.msra.mxu0 0.0
        %544 = vmatprep.subr.mxu0 0.0
        %545 = vmatpush1.msra.mxu0 0.0
        %546 = vmatprep.subr.mxu0 0.0
        %547 = vmatpush1.msra.mxu0 0.0
        %548 = vmatprep.subr.mxu0 0.0
        %549 = vmatpush1.msra.mxu0 0.0
        %550 = vmatprep.subr.mxu0 0.0
        %551 = vmatpush1.msra.mxu0 0.0
        %552 = vmatprep.subr.mxu0 0.0
        %553 = vmatpush1.msra.mxu0 0.0
        %554 = vmatprep.subr.mxu0 0.0
        %555 = vmatpush1.msra.mxu0 0.0
        %556 = vmatprep.subr.mxu0 0.0
        %557 = vmatpush1.msra.mxu0 0.0
        %558 = vmatprep.subr.mxu0 0.0
        %559 = vmatpush1.msra.mxu0 0.0
        %560 = vmatprep.subr.mxu0 0.0
        %561 = vmatpush1.msra.mxu0 0.0
        %562 = vmatprep.subr.mxu0 0.0
        %563 = vmatpush1.msra.mxu0 0.0
        %564 = vmatprep.subr.mxu0 0.0
        %565 = vmatpush1.msra.mxu0 0.0
        %566 = vmatprep.subr.mxu0 0.0
        %567 = vmatpush1.msra.mxu0 0.0
        %568 = vmatprep.subr.mxu0 0.0
        %569 = vmatpush1.msra.mxu0 0.0
        %570 = vmatprep.subr.mxu0 0.0
        %571 = vmatpush1.msra.mxu0 0.0
        %572 = vmatprep.subr.mxu0 0.0
        %573 = vmatpush1.msra.mxu0 0.0
        %574 = vmatprep.mubr.f32.mxu0 0.0
        %575 = vmatmul.mubr.f32.gmra.mrb[0].mxu0 %v506
        %v576 = vpop.f32.mrb[0].mxu0
        %v577 = vadd.f32 0.0, %v576
        %v578 = vpop.f32.mrb[0].mxu0
        %579 = vdwg.mxu0
        %v580 = vld [vmem:[%s4] sm:$0xff]
        %582 = vset.pattern.permute.xlu0 0
        %583 = vperm.xlu0 %582, %v580
        %v584 = vpop.permute.xlu0 %583
        %v586 = vmul.f32 %v577, %v584
        %v587 = vld [vmem:[%s5] sm:$0xff]
        %589 = vset.pattern.permute.xlu0 0
        %590 = vperm.xlu0 %589, %v587
        %v591 = vpop.permute.xlu0 %590
        %v593 = vadd.f32 %v586, %v591
        %v594 = vmax.f32 %v593, 0.0
        %s595 = ssub.s32 %s451, 3
        %v596 = vstv %s595
        %v597 = vadd.s32 %v596, %v473
        %vm598 = vcmp.ge.s32.totalorder %v597, 0
        %vm599 = vcmp.lt.s32.totalorder %v597, 16
        %vm600 = vmand %vm598, %vm599
        %v601 = vsel %vm600, %v594, 0.0
        %603 = vrot.lane.b32.xlu0 %v601, 127
        %v604 = vpop.permute.xlu0 %603
        %606 = vrot.lane.b32.xlu0 %v601, 126
        %v607 = vpop.permute.xlu0 %606
        %609 = vrot.lane.b32.xlu0 %v601, 125
        %v610 = vpop.permute.xlu0 %609
        %612 = vrot.lane.b32.xlu0 %v601, 124
        %v613 = vpop.permute.xlu0 %612
        %615 = vrot.lane.b32.xlu0 %v601, 123
        %v616 = vpop.permute.xlu0 %615
        %618 = vrot.lane.b32.xlu0 %v601, 122
        %v619 = vpop.permute.xlu0 %618
        %v621 = vld [vmem:[%s6] sm:$0xff]
        %vm622 = vcmask 457728
        %v624 = vsel %vm622, %v621, 0
        %626 = vmatprep.subr.mxu0 0.0
        %627 = vmatpush1.msra.mxu0 %v601
        %628 = vmatprep.subr.mxu0 0.0
        %629 = vmatpush1.msra.mxu0 %v604
        %630 = vmatprep.subr.mxu0 0.0
        %631 = vmatpush1.msra.mxu0 %v607
        %632 = vmatprep.subr.mxu0 0.0
        %633 = vmatpush1.msra.mxu0 %v610
        %634 = vmatprep.subr.mxu0 0.0
        %635 = vmatpush1.msra.mxu0 %v613
        %636 = vmatprep.subr.mxu0 0.0
        %637 = vmatpush1.msra.mxu0 %v616
        %638 = vmatprep.subr.mxu0 0.0
        %639 = vmatpush1.msra.mxu0 %v619
        %640 = vmatprep.subr.mxu0 0.0
        %641 = vmatpush1.msra.mxu0 0.0
        %642 = vmatprep.subr.mxu0 0.0
        %643 = vmatpush1.msra.mxu0 0.0
        %644 = vmatprep.subr.mxu0 0.0
        %645 = vmatpush1.msra.mxu0 0.0
        %646 = vmatprep.subr.mxu0 0.0
        %647 = vmatpush1.msra.mxu0 0.0
        %648 = vmatprep.subr.mxu0 0.0
        %649 = vmatpush1.msra.mxu0 0.0
        %650 = vmatprep.subr.mxu0 0.0
        %651 = vmatpush1.msra.mxu0 0.0
        %652 = vmatprep.subr.mxu0 0.0
        %653 = vmatpush1.msra.mxu0 0.0
        %654 = vmatprep.subr.mxu0 0.0
        %655 = vmatpush1.msra.mxu0 0.0
        %656 = vmatprep.subr.mxu0 0.0
        %657 = vmatpush1.msra.mxu0 0.0
        %658 = vmatprep.subr.mxu0 0.0
        %659 = vmatpush1.msra.mxu0 0.0
        %660 = vmatprep.subr.mxu0 0.0
        %661 = vmatpush1.msra.mxu0 0.0
        %662 = vmatprep.subr.mxu0 0.0
        %663 = vmatpush1.msra.mxu0 0.0
        %664 = vmatprep.subr.mxu0 0.0
        %665 = vmatpush1.msra.mxu0 0.0
        %666 = vmatprep.subr.mxu0 0.0
        %667 = vmatpush1.msra.mxu0 0.0
        %668 = vmatprep.subr.mxu0 0.0
        %669 = vmatpush1.msra.mxu0 0.0
        %670 = vmatprep.subr.mxu0 0.0
        %671 = vmatpush1.msra.mxu0 0.0
        %672 = vmatprep.subr.mxu0 0.0
        %673 = vmatpush1.msra.mxu0 0.0
        %674 = vmatprep.subr.mxu0 0.0
        %675 = vmatpush1.msra.mxu0 0.0
        %676 = vmatprep.subr.mxu0 0.0
        %677 = vmatpush1.msra.mxu0 0.0
        %678 = vmatprep.subr.mxu0 0.0
        %679 = vmatpush1.msra.mxu0 0.0
        %680 = vmatprep.subr.mxu0 0.0
        %681 = vmatpush1.msra.mxu0 0.0
        %682 = vmatprep.subr.mxu0 0.0
        %683 = vmatpush1.msra.mxu0 0.0
        %684 = vmatprep.subr.mxu0 0.0
        %685 = vmatpush1.msra.mxu0 0.0
        %686 = vmatprep.subr.mxu0 0.0
        %687 = vmatpush1.msra.mxu0 0.0
        %688 = vmatprep.subr.mxu0 0.0
        %689 = vmatpush1.msra.mxu0 0.0
        %690 = vmatprep.mubr.f32.mxu0 0.0
        %691 = vmatmul.mubr.f32.gmra.mrb[0].mxu0 %v624
        %v692 = vpop.f32.mrb[0].mxu0
        %v693 = vadd.f32 0.0, %v692
        %v694 = vpop.f32.mrb[0].mxu0
        %695 = vdwg.mxu0
        %v696 = vld [vmem:[%s7] sm:$0xff]
        %698 = vset.pattern.permute.xlu0 0
        %699 = vperm.xlu0 %698, %v696
        %v700 = vpop.permute.xlu0 %699
        %v702 = vmul.f32 %v693, %v700
        %v703 = vld [vmem:[%s8] sm:$0xff]
        %705 = vset.pattern.permute.xlu0 0
        %706 = vperm.xlu0 %705, %v703
        %v707 = vpop.permute.xlu0 %706
        %v709 = vadd.f32 %v702, %v707
        %v710 = vmax.f32 %v709, 0.0
        %vm711 = vcmask 130048
        %712 = vst.msk [vmem:[%s417] sm:$0xff] %vm711, %v710
        %s713 = sand.u32 %s267, 1
        %s714 = scalar_lea.sflag [#allocation3], %s713
        %s715 = sand.u32 %s267, 1
        %s716 = smul.addr %s715, 8
        %s717 = scalar_lea.vmem [#allocation2], %s716
        // Predicated region
        $region57: #{tpu_custom_call.1} parent=55 // pred_check
          %p718 = pneg %p277
        $region58: #{tpu_custom_call.1} parent=55 // pred_check_branch
          %720 = sbr.rel (%p718) target = $region60
        $region59: #{tpu_custom_call.1} parent=55 // pred_region
          %s722 = ssub.s32 128, 128
          %723 = vsyncadd %s714, %s722
          %s724 = sadd.s32 %s28, %s27
          %s725 = smul.addr %s724, 128
          %s726 = scalar_lea.hbm %s9, %s725
          %s728 = sshll.u32 %s717, 4
          %s729 = int_to_ptr.vmem [resolvable:$true] %s728
          %731 = dma.vmem_to_hbm [thread:$0]  %s729, 128, %s726, %s714
        $region60: #{tpu_custom_call.1} parent=55 // pred_fallthru
          _
      $region56: #{tpu_custom_call.1} parent=5 // pred_fallthru
        _
      %p732 = scmp.le.s32.totalorder 2, %s18
      // Predicated region
      $region61: #{tpu_custom_call.1} parent=5 // pred_check
        %p733 = pneg %p732
      $region62: #{tpu_custom_call.1} parent=5 // pred_check_branch
        %735 = sbr.rel (%p733) target = $region64
      $region63: #{tpu_custom_call.1} parent=5 // pred_region
        %s736 = ssub.s32 %s18, 2
        // Predicated region
        $region65: #{tpu_custom_call.1} parent=63 // pred_check
          %p737 = pneg %p283
        $region66: #{tpu_custom_call.1} parent=63 // pred_check_branch
          %739 = sbr.rel (%p737) target = $region68
        $region67: #{tpu_custom_call.1} parent=63 // pred_region
          %s740 = sand.u32 %s268, 1
          %s741 = scalar_lea.sflag [#allocation3], %s740
          %s742 = sand.u32 %s268, 1
          %s743 = smul.addr %s742, 8
          %s744 = scalar_lea.vmem [#allocation2], %s743
          %745 = dma.done %s741, 128
        $region68: #{tpu_custom_call.1} parent=63 // pred_fallthru
          _
      $region64: #{tpu_custom_call.1} parent=5 // pred_fallthru
        _
    $region6: #{tpu_custom_call.1} parent=1 // loop_footer
      %s22 = sadd.s32 1, %s18
    $region7: #{tpu_custom_call.1} parent=1 // loop_footer_branch
      %17 = sbr.rel target = $region3
    $region8: #{tpu_custom_call.1} parent=1 // loop_exit
      _
    %746 = vsyncpa [#allocation3], 1
    %s747 = scalar_lea.sflag [#allocation3], 1
    %748 = vsyncpa %s747, 1

</llo_original>
